<compile_context>
chip_gen: v7x
topology: tpu7x:2x2x1
jax: 0.10.0
libtpu: 0.0.40
codegen_flags: <defaults>
</compile_context>

<pallas_src>
import functools

import jax
import jax.numpy as jnp
from jax import lax
from jax.experimental import pallas as pl
from jax.experimental.pallas import tpu as pltpu


_SMALL_FULL_COPY_BYTES = 4 << 20   # in-kernel-gather path keeps a full xs copy in VMEM
_VMEM_BUDGET_BYTES = 12 << 20      # conservative: under v5e's 16 MiB default scoped VMEM


def _round_up(v, m):
    return (v + m - 1) // m * m


def _sublane(itemsize):
    return 8 if itemsize >= 4 else (16 if itemsize == 2 else 32)


# ---------------------------------------------------------------------------
# Kernels
# ---------------------------------------------------------------------------
def _mix_gather_kernel(idx_ref, x_ref, x_full_ref, lam_ref, o_ref, xp_scratch,
                       *, n_rows, tm):
    """In-kernel gather of xs[index] + mixup for one (TM, D) row block.

    idx_ref    : (N,)   int32  SMEM (scalar prefetch)
    x_ref      : (TM,D) VMEM   this step's rows of xs
    x_full_ref : (N, D) VMEM   full xs (constant block index -> fetched once)
    lam_ref    : (TM,1) f32    VMEM
    o_ref      : (TM,D)        output rows
    xp_scratch : (TM,D) VMEM   gathered permuted rows
    """
    base = pl.program_id(0) * tm
    rows = jnp.minimum(tm, n_rows - base)          # guard the partial last block

    def gather_row(r, carry):
        src = idx_ref[base + r]
        xp_scratch[pl.ds(r, 1), :] = x_full_ref[pl.ds(src, 1), :]
        return carry

    lax.fori_loop(0, rows, gather_row, 0)

    x = x_ref[...].astype(jnp.float32)
    xp = xp_scratch[...].astype(jnp.float32)
    lam = lam_ref[...]                              # (TM,1) f32 -> free lane broadcast
    # o = x + lam*(xp - x)  ==  (1 - lam)*x + lam*xp  (one fewer VALU op, one fused store)
    o_ref[...] = (x + lam * (xp - x)).astype(o_ref.dtype)


def _mix_dense_kernel(x_ref, xp_ref, lam_ref, o_ref):
    """Mixup with permuted rows pre-gathered in the wrapper (large-N fallback)."""
    x = x_ref[...].astype(jnp.float32)
    xp = xp_ref[...].astype(jnp.float32)
    lam = lam_ref[...]
    o_ref[...] = (x + lam * (xp - x)).astype(o_ref.dtype)


# ---------------------------------------------------------------------------
# Wrapper
# ---------------------------------------------------------------------------
def _pick_tm(N, D, itemsize, use_gather):
    sub = _sublane(itemsize)
    dp = _round_up(D, 128)                          # lane-padded footprint (budget only)
    # Aim for >=2 grid steps when N allows (v7x 2-TC sharding / pipeline overlap).
    tm = _round_up(-(-N // 2), sub)
    tm = min(tm, _round_up(N, sub))
    # VMEM clamp: double-buffered tiles (+ scratch / resident full copy) within budget.
    if use_gather:
        fixed = N * dp * itemsize                   # resident full copy of xs
        per_tm = 5 * dp * itemsize + 2 * 4          # 2x x-in + 2x out + scratch + 2x lam
    else:
        fixed = 0
        per_tm = 6 * dp * itemsize + 2 * 4          # 2 bufs x (x, xp, out) + lam
    cap = max(sub, ((_VMEM_BUDGET_BYTES - fixed) // per_tm) // sub * sub)
    return max(sub, min(tm, cap))


def aug_module_forward(xs, lam, y, index, *, donate_xs=False, force_path=None):
    """Pallas TPU implementation of AugModule.forward. Returns (x_mix, y_a, y_b)."""
    N, D = xs.shape
    dtype = xs.dtype
    itemsize = jnp.dtype(dtype).itemsize
    index = index.astype(jnp.int32)
    lam_col = lam.astype(jnp.float32).reshape(N, 1)

    full_copy_bytes = N * _round_up(D, 128) * itemsize
    use_gather = full_copy_bytes <= _SMALL_FULL_COPY_BYTES
    if force_path == "gather":
        use_gather = True
    elif force_path == "dense":
        use_gather = False

    tm = _pick_tm(N, D, itemsize, use_gather)
    grid = ((N + tm - 1) // tm,)

    if use_gather:
        cost = pl.CostEstimate(
            flops=3 * N * D, transcendentals=0,
            bytes_accessed=3 * N * D * itemsize + N * 8)
        x_mix = pl.pallas_call(
            functools.partial(_mix_gather_kernel, n_rows=N, tm=tm),
            out_shape=jax.ShapeDtypeStruct((N, D), dtype),
            grid_spec=pltpu.PrefetchScalarGridSpec(
                num_scalar_prefetch=1,
                grid=grid,
                in_specs=[
                    pl.BlockSpec((tm, D), lambda i, idx: (i, 0)),   # xs row block
                    pl.BlockSpec((N, D), lambda i, idx: (0, 0)),    # full xs, fetched once
                    pl.BlockSpec((tm, 1), lambda i, idx: (i, 0)),   # lam column (f32)
                ],
                out_specs=pl.BlockSpec((tm, D), lambda i, idx: (i, 0)),
                scratch_shapes=[pltpu.VMEM((tm, D), dtype)],
            ),
            compiler_params=pltpu.CompilerParams(
                dimension_semantics=("parallel",)),
            cost_estimate=cost,
        )(index, xs, xs, lam_col)
    else:
        # Large-N fallback: pre-gather the permuted rows once (dense second input) so the
        # kernel keeps big rectangular tiles. Never 1-row pl.Element blocks.
        xs_perm = jnp.take(xs, index, axis=0)
        cost = pl.CostEstimate(
            flops=3 * N * D, transcendentals=0,
            bytes_accessed=3 * N * D * itemsize + N * 4)
        x_mix = pl.pallas_call(
            _mix_dense_kernel,
            out_shape=jax.ShapeDtypeStruct((N, D), dtype),
            grid=grid,
            in_specs=[
                pl.BlockSpec((tm, D), lambda i: (i, 0)),
                pl.BlockSpec((tm, D), lambda i: (i, 0)),
                pl.BlockSpec((tm, 1), lambda i: (i, 0)),
            ],
            out_specs=pl.BlockSpec((tm, D), lambda i: (i, 0)),
            compiler_params=pltpu.CompilerParams(
                dimension_semantics=("parallel",)),
            cost_estimate=cost,
            # Safe here: step i of the aliased xs is read and written only by step i
            # (permuted rows were materialized up front). Enable when callers donate xs.
            input_output_aliases=({0: 0} if donate_xs else {}),
        )(xs, xs_perm, lam_col)

    y_a = y
    y_b = jnp.take(y, index, axis=0)   # tiny integer gather, stays in plain JAX
    return x_mix, y_a, y_b


if __name__ == "__main__":
    key = jax.random.PRNGKey(0)
    k_x, k_lam, k_y, k_perm = jax.random.split(key, 4)

    # Flattened PMNIST-style mini-batch; D=784 exercises the non-multiple-of-128 lane tail.
    N, D = 8, 784
    xs = jax.random.normal(k_x, (N, D), dtype=jnp.float32)
    lam = jax.random.uniform(k_lam, (N,), dtype=jnp.float32)
    y = jax.random.randint(k_y, (N,), 0, 10, dtype=jnp.int32)
    index = jax.random.permutation(k_perm, N).astype(jnp.int32)

    # Reference (plain JAX) semantics of the PyTorch module.
    lam_c = lam[:, None]
    x_mix_ref = (1.0 - lam_c) * xs + lam_c * xs[index, :]

    # Primary path for PMNIST-scale inputs: fused in-kernel gather.
    x_mix, y_a, y_b = aug_module_forward(xs, lam, y, index, force_path="gather")
    x_mix = jax.block_until_ready(x_mix)
    assert jnp.allclose(x_mix, x_mix_ref, atol=1e-5, rtol=1e-5)
    assert jnp.array_equal(y_a, y)
    assert jnp.array_equal(y_b, y[index])

    # Large-N fallback path (pre-gathered dense input) — identical semantics.
    x_mix2, _, _ = aug_module_forward(xs, lam, y, index, force_path="dense")
    x_mix2 = jax.block_until_ready(x_mix2)
    assert jnp.allclose(x_mix2, x_mix_ref, atol=1e-5, rtol=1e-5)

    print("KERNEL_OK")
</pallas_src>

<mosaic_0001>
module attributes {stable_mosaic.version = 11 : i64} {
  func.func @_mix_gather_kernel(%arg0: i32, %arg1: memref<8xi32, #tpu.memory_space<smem>>, %arg2: memref<8x784xf32, #tpu.memory_space<vmem>>, %arg3: memref<8x784xf32, #tpu.memory_space<vmem>>, %arg4: memref<8x1xf32, #tpu.memory_space<vmem>>, %arg5: memref<8x784xf32, #tpu.memory_space<vmem>>, %arg6: memref<8x784xf32, #tpu.memory_space<vmem>>) attributes {dimension_semantics = [#tpu.dimension_semantics<parallel>], iteration_bounds = array<i64: 1>, scalar_prefetch = 1 : i64, scratch_operands = 1 : i64, tpu.core_type = #tpu.core_type<tc>, window_params = [{transform_indices = @transform_0, window_bounds = array<i64: 8, 784>}, {pipeline_mode = #tpu.pipeline_mode<synchronous>, transform_indices = @transform_1, window_bounds = array<i64: 8, 784>}, {transform_indices = @transform_2, window_bounds = array<i64: 8, 1>}, {transform_indices = @transform_3, window_bounds = array<i64: 8, 784>}]} {
    %c8_i32 = arith.constant 8 : i32
    %0 = arith.muli %arg0, %c8_i32 : i32
    %c8_i32_0 = arith.constant 8 : i32
    %1 = arith.subi %c8_i32_0, %0 : i32
    %c8_i32_1 = arith.constant 8 : i32
    %2 = arith.minsi %c8_i32_1, %1 : i32
    %c0_i32 = arith.constant 0 : i32
    %c0_i32_2 = arith.constant 0 : i32
    %3 = arith.subi %2, %c0_i32_2 : i32
    %4 = arith.addi %c0_i32_2, %3 : i32
    %c1_i32 = arith.constant 1 : i32
    scf.for %arg7 = %c0_i32_2 to %4 step %c1_i32  : i32 {
      %13 = arith.addi %0, %arg7 : i32
      %14 = arith.index_cast %13 : i32 to index
      %15 = memref.load %arg1[%14] : memref<8xi32, #tpu.memory_space<smem>>
      %16 = arith.index_cast %15 : i32 to index
      %c0_10 = arith.constant 0 : index
      %17 = vector.load %arg3[%16, %c0_10] : memref<8x784xf32, #tpu.memory_space<vmem>>, vector<1x784xf32>
      %18 = arith.index_cast %arg7 : i32 to index
      %c0_11 = arith.constant 0 : index
      %19 = vector.load %arg6[%18, %c0_11] : memref<8x784xf32, #tpu.memory_space<vmem>>, vector<1x784xf32>
      tpu.vector_store %arg6[%18, %c0_11], %17 {strides = array<i32>} : memref<8x784xf32, #tpu.memory_space<vmem>>, vector<1x784xf32>,
    }
    %c0 = arith.constant 0 : index
    %c0_3 = arith.constant 0 : index
    %5 = vector.load %arg2[%c0, %c0_3] : memref<8x784xf32, #tpu.memory_space<vmem>>, vector<8x784xf32>
    %c0_4 = arith.constant 0 : index
    %c0_5 = arith.constant 0 : index
    %6 = vector.load %arg6[%c0_4, %c0_5] : memref<8x784xf32, #tpu.memory_space<vmem>>, vector<8x784xf32>
    %c0_6 = arith.constant 0 : index
    %c0_7 = arith.constant 0 : index
    %7 = vector.load %arg4[%c0_6, %c0_7] : memref<8x1xf32, #tpu.memory_space<vmem>>, vector<8x1xf32>
    %8 = arith.subf %6, %5 : vector<8x784xf32>
    %9 = vector.broadcast %7 : vector<8x1xf32> to vector<8x784xf32>
    %10 = arith.mulf %9, %8 : vector<8x784xf32>
    %11 = arith.addf %5, %10 : vector<8x784xf32>
    %c0_8 = arith.constant 0 : index
    %c0_9 = arith.constant 0 : index
    %12 = vector.load %arg5[%c0_8, %c0_9] : memref<8x784xf32, #tpu.memory_space<vmem>>, vector<8x784xf32>
    tpu.vector_store %arg5[%c0_8, %c0_9], %11 {strides = array<i32>} : memref<8x784xf32, #tpu.memory_space<vmem>>, vector<8x784xf32>,
    return
  }
  func.func @transform_0(%arg0: i32, %arg1: memref<8xi32, #tpu.memory_space<smem>>) -> (i32, i32) {
    %c0_i32 = arith.constant 0 : i32
    %c0_i32_0 = arith.constant 0 : i32
    return %arg0, %c0_i32 : i32, i32
  }
  func.func @transform_1(%arg0: i32, %arg1: memref<8xi32, #tpu.memory_space<smem>>) -> (i32, i32) {
    %c0_i32 = arith.constant 0 : i32
    %c0_i32_0 = arith.constant 0 : i32
    %c0_i32_1 = arith.constant 0 : i32
    return %c0_i32, %c0_i32_0 : i32, i32
  }
  func.func @transform_2(%arg0: i32, %arg1: memref<8xi32, #tpu.memory_space<smem>>) -> (i32, i32) {
    %c0_i32 = arith.constant 0 : i32
    %c0_i32_0 = arith.constant 0 : i32
    return %arg0, %c0_i32 : i32, i32
  }
  func.func @transform_3(%arg0: i32, %arg1: memref<8xi32, #tpu.memory_space<smem>>) -> (i32, i32) {
    %c0_i32 = arith.constant 0 : i32
    %c0_i32_0 = arith.constant 0 : i32
    return %arg0, %c0_i32 : i32, i32
  }
}

</mosaic_0001>

<llo_original>
// kernel: tpu_custom_call.1
$region0: #{tpu_custom_call.1}
  #allocation0 [shape = 'u32[]', space=smem, size = 0x4, offset = 0x4, fixed_abs, tag = 'smem constant byte address 0x4 - core index']
  #allocation1 [shape = 'u32[144,128]{1,0:T(1,128)}', space=vmem, size = 0x12000, scoped, tag = 'internal scratch']
  #allocation2 [shape = 'f32[8,784]{1,0:T(8,128)}', space=vmem, size = 0x7000, scoped, tag = 'scratch operand']
  #allocation3 [shape = 's32[1]{0}', space=sflag, size = 0x4, scoped, tag = 'scoped memory for tpu_custom_call.1']
  #allocation4 [shape = 'u8[512]{0}', space=smem, size = 0x200, scoped, tag = 'prefetched SMEM operand 0']
  %s0 = inlined_call_operand.vmem [shape: s32[8], index: 0, kind: input, shape index: {}]
  %s1 = inlined_call_operand.hbm [shape: f32[8,784], index: 1, kind: input, shape index: {}]
  %s2 = inlined_call_operand.hbm [shape: f32[8,784], index: 2, kind: input, shape index: {}]
  %s3 = inlined_call_operand.vmem [shape: f32[8,1], index: 3, kind: input, shape index: {}]
  %s4 = inlined_call_operand.hbm [shape: f32[8,784], index: 4, kind: output, shape index: {}]
  %s5 = sld [smem:[#allocation0]]
  $region37: #{tpu_custom_call.1} parent=0
    _
  %s7 = ssub.s32 1, %s5
  %s8 = scalar_select 0, %s7, %s5
  %s9 = sshll.u32 %s0, 4
  %s10 = int_to_ptr.vmem [resolvable:$true] %s9
  %12 = dma.vmem_to_smem %s10, 16, [#allocation4], [#allocation3]
  %13 = dma.done [#allocation3], 16
  %14 = sfence
  $region1: #{tpu_custom_call.1} parent=0
    #allocation5 [shape = 'u8[28672]{0}', space=vmem, size = 0x7000, scoped, tag = 'input window, operand 1, single buffered']
    #allocation6 [shape = 's32[1]{0}', space=sflag, size = 0x4, scoped, tag = 'scoped memory for tpu_custom_call.1']
    #allocation7 [shape = 's32[1]{0}', space=sflag, size = 0x4, scoped, tag = 'scoped memory for tpu_custom_call.1']
    #allocation8 [shape = 'u8[28672]{0}', space=vmem, size = 0x7000, scoped, tag = 'input window, operand 2, single buffered']
    #allocation9 [shape = 's32[1]{0}', space=sflag, size = 0x4, scoped, tag = 'scoped memory for tpu_custom_call.1']
    #allocation10 [shape = 'u8[28672]{0}', space=vmem, size = 0x7000, scoped, tag = 'output window, operand 0, single buffered']
    %15 = vsyncpa [#allocation6], 0
    %16 = vsyncpa [#allocation9], 0
    %17 = vsyncpa [#allocation7], 0
    // Predicated region
    $region2: #{tpu_custom_call.1} parent=1 // pred_check
      _
    $region3: #{tpu_custom_call.1} parent=1 // pred_check_branch
      %19 = sbr.rel (0) target = $region5
    $region4: #{tpu_custom_call.1} parent=1 // pred_region
      %s21 = ssub.s32 896, 896
      %22 = vsyncadd [#allocation6], %s21
      %s24 = sshll.u32 [#allocation5], 4
      %s25 = int_to_ptr.vmem [resolvable:$true] %s24
      %27 = dma.hbm_to_vmem [thread:$0]  %s1, 896, %s25, [#allocation6]
    $region5: #{tpu_custom_call.1} parent=1 // pred_fallthru
      _
    // Predicated region
    $region6: #{tpu_custom_call.1} parent=1 // pred_check
      _
    $region7: #{tpu_custom_call.1} parent=1 // pred_check_branch
      %29 = sbr.rel (0) target = $region9
    $region8: #{tpu_custom_call.1} parent=1 // pred_region
      %s31 = ssub.s32 896, 896
      %32 = vsyncadd [#allocation9], %s31
      %s34 = sshll.u32 [#allocation8], 4
      %s35 = int_to_ptr.vmem [resolvable:$true] %s34
      %37 = dma.hbm_to_vmem [thread:$0]  %s2, 896, %s35, [#allocation9]
    $region9: #{tpu_custom_call.1} parent=1 // pred_fallthru
      _
    // Predicated region
    $region10: #{tpu_custom_call.1} parent=1 // pred_check
      _
    $region11: #{tpu_custom_call.1} parent=1 // pred_check_branch
      %39 = sbr.rel (0) target = $region13
    $region12: #{tpu_custom_call.1} parent=1 // pred_region
      _
    $region13: #{tpu_custom_call.1} parent=1 // pred_fallthru
      _
    // Predicated region
    $region14: #{tpu_custom_call.1} parent=1 // pred_check
      _
    $region15: #{tpu_custom_call.1} parent=1 // pred_check_branch
      %41 = sbr.rel (0) target = $region17
    $region16: #{tpu_custom_call.1} parent=1 // pred_region
      %42 = dma.done [#allocation6], 896
    $region17: #{tpu_custom_call.1} parent=1 // pred_fallthru
      _
    // Predicated region
    $region18: #{tpu_custom_call.1} parent=1 // pred_check
      _
    $region19: #{tpu_custom_call.1} parent=1 // pred_check_branch
      %44 = sbr.rel (0) target = $region21
    $region20: #{tpu_custom_call.1} parent=1 // pred_region
      %45 = dma.done [#allocation9], 896
    $region21: #{tpu_custom_call.1} parent=1 // pred_fallthru
      _
    %s46 = smul.u32 0, 8
    %s47 = ssub.s32 8, %s46
    %p48 = scmp.lt.s32.totalorder %s47, 8
    %s49 = scalar_select %p48, %s47, 8
    // While loop
    $region22: #{tpu_custom_call.1} parent=1 // loop_pre_header
      _
    $region23: #{tpu_custom_call.1} parent=1 // loop_header
      %s51 = sphi 0, %s53
      %p52 = scmp.ge.s32.totalorder %s51, %s49
    $region24: #{tpu_custom_call.1} parent=1 // loop_header_branch
      %55 = sbr.rel (%p52) target = $region28
    $region25: #{tpu_custom_call.1} parent=1 // loop_body
      %s56 = sadd.s32 %s46, %s51
      %s57 = sld [smem:[#allocation4 + %s56]]
      %s58 = sshra.s32 %s57, 3
      %s59 = sand.u32 %s57, 7
      %s60 = sshra.s32 %s57, 3
      %s61 = sand.u32 %s57, 7
      %s62 = smul.u32 %s58, 7
      %s63 = smul.u32 %s62, 8
      %s64 = sadd.s32 %s63, %s61
      %s65 = scalar_lea.vmem [#allocation8], %s64
      %v66 = vld [vmem:[%s65] ss:$8 sm:$0xf]
      %v67 = vld [vmem:[%s65] ss:$8 sm:$0x70]
      %v68 = vor.u32 %v66, %v67
      %v69 = vlaneseq
      %vm70 = vcmp.ge.s32.totalorder %v69, 0
      %vm71 = vcmp.lt.s32.totalorder %v69, 784
      %vm72 = vmand %vm70, %vm71
      %s73 = sshra.s32 %s51, 3
      %s74 = sand.u32 %s51, 7
      %s75 = sshra.s32 %s51, 3
      %s76 = sand.u32 %s51, 7
      %s77 = smul.u32 %s73, 7
      %s78 = smul.u32 %s77, 8
      %s79 = sadd.s32 %s78, %s76
      %s80 = scalar_lea.vmem [#allocation2], %s79
      %81 = vst.msk [vmem:[%s80] ss:$8 sm:$0xf] %vm72, %v68
      %82 = vst.msk [vmem:[%s80] ss:$8 sm:$0x70] %vm72, %v68
    $region26: #{tpu_custom_call.1} parent=1 // loop_footer
      %s53 = sadd.s32 %s51, 1
    $region27: #{tpu_custom_call.1} parent=1 // loop_footer_branch
      %50 = sbr.rel target = $region23
    $region28: #{tpu_custom_call.1} parent=1 // loop_exit
      _
    %v83 = vld [vmem:[#allocation5] sm:$0xff]
    %v84 = vld [vmem:[#allocation5 + $0x8] sm:$0xff]
    %v85 = vld [vmem:[#allocation5 + $0x10] sm:$0xff]
    %v86 = vld [vmem:[#allocation5 + $0x18] sm:$0xff]
    %v87 = vld [vmem:[#allocation5 + $0x20] sm:$0xff]
    %v88 = vld [vmem:[#allocation5 + $0x28] sm:$0xff]
    %v89 = vld [vmem:[#allocation5 + $0x30] sm:$0xff]
    %v90 = vld [vmem:[#allocation2] sm:$0xff]
    %v91 = vld [vmem:[#allocation2 + $0x8] sm:$0xff]
    %v92 = vld [vmem:[#allocation2 + $0x10] sm:$0xff]
    %v93 = vld [vmem:[#allocation2 + $0x18] sm:$0xff]
    %v94 = vld [vmem:[#allocation2 + $0x20] sm:$0xff]
    %v95 = vld [vmem:[#allocation2 + $0x28] sm:$0xff]
    %v96 = vld [vmem:[#allocation2 + $0x30] sm:$0xff]
    %v97 = vld [vmem:[%s3] sm:$0xff]
    %v98 = vsub.f32 %v90, %v83
    %v99 = vsub.f32 %v91, %v84
    %v100 = vsub.f32 %v92, %v85
    %v101 = vsub.f32 %v93, %v86
    %v102 = vsub.f32 %v94, %v87
    %v103 = vsub.f32 %v95, %v88
    %v104 = vsub.f32 %v96, %v89
    %106 = vset.pattern.permute.xlu0 0
    %107 = vperm.xlu0 %106, %v97
    %v108 = vpop.permute.xlu0 %107
    %v110 = vmul.f32 %v108, %v98
    %v111 = vmul.f32 %v108, %v99
    %v112 = vmul.f32 %v108, %v100
    %v113 = vmul.f32 %v108, %v101
    %v114 = vmul.f32 %v108, %v102
    %v115 = vmul.f32 %v108, %v103
    %v116 = vmul.f32 %v108, %v104
    %v117 = vadd.f32 %v83, %v110
    %v118 = vadd.f32 %v84, %v111
    %v119 = vadd.f32 %v85, %v112
    %v120 = vadd.f32 %v86, %v113
    %v121 = vadd.f32 %v87, %v114
    %v122 = vadd.f32 %v88, %v115
    %v123 = vadd.f32 %v89, %v116
    %124 = vst [vmem:[#allocation10] sm:$0xff] %v117
    %125 = vst [vmem:[#allocation10 + $0x8] sm:$0xff] %v118
    %126 = vst [vmem:[#allocation10 + $0x10] sm:$0xff] %v119
    %127 = vst [vmem:[#allocation10 + $0x18] sm:$0xff] %v120
    %128 = vst [vmem:[#allocation10 + $0x20] sm:$0xff] %v121
    %129 = vst [vmem:[#allocation10 + $0x28] sm:$0xff] %v122
    %vm130 = vcmask 130048
    %131 = vst.msk [vmem:[#allocation10 + $0x30] sm:$0xff] %vm130, %v123
    // Predicated region
    $region29: #{tpu_custom_call.1} parent=1 // pred_check
      _
    $region30: #{tpu_custom_call.1} parent=1 // pred_check_branch
      %133 = sbr.rel (0) target = $region32
    $region31: #{tpu_custom_call.1} parent=1 // pred_region
      %s135 = ssub.s32 896, 896
      %136 = vsyncadd [#allocation7], %s135
      %s138 = sshll.u32 [#allocation10], 4
      %s139 = int_to_ptr.vmem [resolvable:$true] %s138
      %141 = dma.vmem_to_hbm [thread:$0]  %s139, 896, %s4, [#allocation7]
    $region32: #{tpu_custom_call.1} parent=1 // pred_fallthru
      _
    // Predicated region
    $region33: #{tpu_custom_call.1} parent=1 // pred_check
      _
    $region34: #{tpu_custom_call.1} parent=1 // pred_check_branch
      %143 = sbr.rel (0) target = $region36
    $region35: #{tpu_custom_call.1} parent=1 // pred_region
      %144 = dma.done [#allocation7], 896
    $region36: #{tpu_custom_call.1} parent=1 // pred_fallthru
      _
    %145 = vsyncpa [#allocation6], 1
    %146 = vsyncpa [#allocation9], 1
    %147 = vsyncpa [#allocation7], 1

</llo_original>
